<compile_context>
chip_gen: v5e
topology: v5e:2x2
jax: 0.10.0
libtpu: 0.0.40
codegen_flags: <defaults>
</compile_context>

<pallas_src>
import jax
import jax.numpy as jnp
from jax.experimental import pallas as pl
from jax.experimental.pallas import tpu as pltpu

INPUT_DIM = 64
HIDDEN = 128
ATTN_DIM = 128
COND_DIMS = (15, 6, 2)
COND_TOTAL = sum(COND_DIMS)     # 23
COND_PAD = 32                   # sublane-aligned contraction depth for folded cond matmul
NUM_TIMESTEPS = 10


def _silu(x):
    return x * jax.nn.sigmoid(x)


def diffusion_train_kernel(
    cond_ref, temb_ref, noise_ref,
    wcvp_ref, bcvp_ref,
    wt1_ref, bt1_ref, wt2_ref, bt2_ref,
    wn1a_ref, wn1b_ref, bn1_ref,
    wn2_ref, bn2_ref, wn3_ref, bn3_ref,
    sse_ref,
):
    f32 = jnp.float32

    # CrossAttention with seq-len 1 on both sides: softmax over the singleton key axis
    # is exactly 1.0, so attended == V and the K/Q/score/softmax math (and H_noisy)
    # drops out.  The remaining linear chain cond -> cond_proj -> V -> proj is folded
    # host-side into a single [COND_PAD, INPUT_DIM] weight + [1, INPUT_DIM] bias.
    x_attn = jnp.dot(cond_ref[...], wcvp_ref[...], preferred_element_type=f32) + bcvp_ref[...]

    # time_embed: Linear -> SiLU -> Linear (input is the sinusoidal timestep embedding)
    h = jnp.dot(temb_ref[...], wt1_ref[...], preferred_element_type=f32) + bt1_ref[...]
    h = _silu(h)
    t_emb = jnp.dot(h, wt2_ref[...], preferred_element_type=f32) + bt2_ref[...]

    # noise_predictor on concat([x_attn, t_emb]) — concat folded into split first-layer weight
    h1 = (jnp.dot(x_attn, wn1a_ref[...], preferred_element_type=f32)
          + jnp.dot(t_emb, wn1b_ref[...], preferred_element_type=f32)
          + bn1_ref[...])
    h1 = _silu(h1)
    h2 = jnp.dot(h1, wn2_ref[...], preferred_element_type=f32) + bn2_ref[...]
    h2 = _silu(h2)
    pred_noise = jnp.dot(h2, wn3_ref[...], preferred_element_type=f32) + bn3_ref[...]

    # Partial sum of squared errors for this batch tile.  Broadcast into a full (8,128)
    # vreg so the store is a single unmasked lane-dense vst; the wrapper sums the tiles
    # and divides by B*INPUT_DIM (torch F.mse_loss mean semantics).
    diff = pred_noise - noise_ref[...]
    sse = jnp.sum(diff * diff)
    sse_ref[...] = jnp.full((8, 128), sse, f32)


def _beta_schedule():
    betas = jnp.linspace(1e-4, 0.02, NUM_TIMESTEPS, dtype=jnp.float32)
    alphas = 1.0 - betas
    alphas_cumprod = jnp.cumprod(alphas)
    return betas, alphas, alphas_cumprod


def _timestep_embedding(t, dim):
    half = dim // 2
    emb = jnp.log(jnp.float32(10000.0)) / (half - 1)
    freqs = jnp.exp(jnp.arange(half, dtype=jnp.float32) * -emb)
    args = t.astype(jnp.float32)[:, None] * freqs[None, :]
    return jnp.concatenate([jnp.sin(args), jnp.cos(args)], axis=1)


def init_params(key):
    """PyTorch-style uniform(-1/sqrt(fan_in), 1/sqrt(fan_in)) init, deterministic."""
    ks = jax.random.split(key, 10)

    def lin(k, fan_in, fan_out, bias=True):
        bound = 1.0 / jnp.sqrt(jnp.float32(fan_in))
        kw, kb = jax.random.split(k)
        w = jax.random.uniform(kw, (fan_in, fan_out), jnp.float32, -bound, bound)
        if not bias:
            return (w,)
        b = jax.random.uniform(kb, (1, fan_out), jnp.float32, -bound, bound)
        return w, b

    wc, bc = lin(ks[0], COND_TOTAL, HIDDEN)
    wt1, bt1 = lin(ks[1], INPUT_DIM, HIDDEN)
    wt2, bt2 = lin(ks[2], HIDDEN, HIDDEN)
    (wk,) = lin(ks[3], INPUT_DIM, ATTN_DIM, bias=False)
    (wq,) = lin(ks[4], HIDDEN, ATTN_DIM, bias=False)
    (wv,) = lin(ks[5], HIDDEN, ATTN_DIM, bias=False)
    wp, bp = lin(ks[6], ATTN_DIM, INPUT_DIM)
    wn1, bn1 = lin(ks[7], INPUT_DIM + HIDDEN, HIDDEN)
    wn1a, wn1b = wn1[:INPUT_DIM], wn1[INPUT_DIM:]
    wn2, bn2 = lin(ks[8], HIDDEN, HIDDEN)
    wn3, bn3 = lin(ks[9], HIDDEN, INPUT_DIM)
    return (wc, bc, wt1, bt1, wt2, bt2, wk, wq, wv, wp, bp,
            wn1a, wn1b, bn1, wn2, bn2, wn3, bn3)


def fold_params(params):
    """Fold the cond -> cond_proj -> V -> proj linear chain (valid because the length-1
    softmax is identically 1).  Re-computed every call so parameter updates stay correct.
    wk/wq are dropped: they only feed the degenerate softmax."""
    (wc, bc, wt1, bt1, wt2, bt2, wk, wq, wv, wp, bp,
     wn1a, wn1b, bn1, wn2, bn2, wn3, bn3) = params
    del wk, wq
    wvp = wv @ wp                                                     # [HIDDEN, INPUT_DIM]
    wcvp = jnp.pad(wc @ wvp, ((0, COND_PAD - COND_TOTAL), (0, 0)))    # [COND_PAD, INPUT_DIM]
    bcvp = bc @ wvp + bp                                              # [1, INPUT_DIM]
    return (wcvp, bcvp, wt1, bt1, wt2, bt2, wn1a, wn1b, bn1, wn2, bn2, wn3, bn3)


def _pick_batch_tile(batch):
    # Largest power-of-two tile (<=256) dividing the batch; fall back to a single tile
    # (block == full extent) for small/odd batches.
    for tb in (256, 128, 64, 32, 16, 8):
        if batch % tb == 0:
            return tb
    return batch


def conditional_diffusion_train(H, antibiotic_cond, mechanism_cond, transfer_cond,
                                params, t, noise):
    """mode='train' forward: returns the scalar MSE loss (torch semantics).

    H enters the torch forward only through the attention key of a length-1 softmax,
    which is identically 1.0, so H (and the q(x_t) noising) cancels out of the loss;
    it is accepted for API parity but not sent to the kernel.
    """
    del H
    B = noise.shape[0]
    cond = jnp.concatenate([antibiotic_cond, mechanism_cond, transfer_cond], axis=1)
    cond = jnp.pad(cond, ((0, 0), (0, COND_PAD - cond.shape[1])))
    temb_in = _timestep_embedding(t, INPUT_DIM)             # [B, input_dim]

    folded = fold_params(params)
    tile_b = _pick_batch_tile(B)
    num_tiles = B // tile_b

    def act_spec(feat):
        return pl.BlockSpec((tile_b, feat), lambda i: (i, 0))

    in_specs = (
        [act_spec(COND_PAD), act_spec(INPUT_DIM), act_spec(INPUT_DIM)]
        # weights/biases stay resident in VMEM across the batch grid (block index fixed)
        + [pl.BlockSpec(p.shape, lambda i: (0, 0)) for p in folded]
    )

    sse_blocks = pl.pallas_call(
        diffusion_train_kernel,
        out_shape=jax.ShapeDtypeStruct((8, 128 * num_tiles), jnp.float32),
        grid=(num_tiles,),
        in_specs=in_specs,
        out_specs=pl.BlockSpec((8, 128), lambda i: (0, i)),
        compiler_params=pltpu.CompilerParams(
            dimension_semantics=("parallel",)),   # shard batch tiles across TCs (v7x)
    )(cond, temb_in, noise, *folded)

    partial_sse = sse_blocks[0].reshape(num_tiles, 128)[:, 0]
    return jnp.sum(partial_sse) / jnp.float32(B * INPUT_DIM)


# TODO(synk): mode='generate' (the reverse-diffusion sampling loop with fresh gaussian
# noise every step) is a sequential host-driven loop; it would reuse this kernel's
# dense blocks per step but is not implemented here.


def _reference_train(H, ab, mech, tr, params, t, noise):
    """Pure-JAX reference mirroring the PyTorch module (including the dead K/Q/softmax
    and the q(x_t) noising) to validate the kernel's algebraic simplifications."""
    (wc, bc, wt1, bt1, wt2, bt2, wk, wq, wv, wp, bp,
     wn1a, wn1b, bn1, wn2, bn2, wn3, bn3) = params
    cond = jnp.concatenate([ab, mech, tr], axis=1)
    cond_proj = cond @ wc + bc
    _, _, acp = _beta_schedule()
    sac = jnp.sqrt(acp[t])[:, None]
    somac = jnp.sqrt(1.0 - acp[t])[:, None]
    H_noisy = sac * H + somac * noise
    temb = _timestep_embedding(t, INPUT_DIM)
    h = _silu(temb @ wt1 + bt1)
    t_emb = h @ wt2 + bt2
    K = H_noisy @ wk
    Q = cond_proj @ wq
    V = cond_proj @ wv
    scores = jnp.sum(Q * K, axis=-1, keepdims=True) / jnp.sqrt(jnp.float32(ATTN_DIM))
    attn = jax.nn.softmax(scores, axis=-1)
    x_attn = (attn * V) @ wp + bp
    h1 = _silu(x_attn @ wn1a + t_emb @ wn1b + bn1)
    h2 = _silu(h1 @ wn2 + bn2)
    pred = h2 @ wn3 + bn3
    return jnp.mean((pred - noise) ** 2)


if __name__ == "__main__":
    B = 8
    key = jax.random.PRNGKey(0)
    k_param, k_H, k_ab, k_me, k_tr, k_t, k_noise = jax.random.split(key, 7)

    params = init_params(k_param)
    H = jax.random.normal(k_H, (B, INPUT_DIM), jnp.float32)
    antibiotic_cond = jax.random.normal(k_ab, (B, COND_DIMS[0]), jnp.float32)
    mechanism_cond = jax.random.normal(k_me, (B, COND_DIMS[1]), jnp.float32)
    transfer_cond = jax.random.normal(k_tr, (B, COND_DIMS[2]), jnp.float32)
    t = jax.random.randint(k_t, (B,), 0, NUM_TIMESTEPS)
    noise = jax.random.normal(k_noise, (B, INPUT_DIM), jnp.float32)

    loss = conditional_diffusion_train(
        H, antibiotic_cond, mechanism_cond, transfer_cond, params, t, noise)
    loss = jax.block_until_ready(loss)

    ref = _reference_train(
        H, antibiotic_cond, mechanism_cond, transfer_cond, params, t, noise)
    # rtol loosened slightly vs 1e-5: the host-side (wc@wv@wp) folding reassociates f32
    # matmuls, which is exact math but not bit-identical floating point.
    assert jnp.allclose(loss, ref, rtol=1e-4, atol=1e-5), (loss, ref)

    print("KERNEL_OK")
</pallas_src>

<mosaic_0001>
module attributes {stable_mosaic.version = 11 : i64} {
  func.func @diffusion_train_kernel(%arg0: i32, %arg1: memref<8x32xf32, #tpu.memory_space<vmem>>, %arg2: memref<8x64xf32, #tpu.memory_space<vmem>>, %arg3: memref<8x64xf32, #tpu.memory_space<vmem>>, %arg4: memref<32x64xf32, #tpu.memory_space<vmem>>, %arg5: memref<1x64xf32, #tpu.memory_space<vmem>>, %arg6: memref<64x128xf32, #tpu.memory_space<vmem>>, %arg7: memref<1x128xf32, #tpu.memory_space<vmem>>, %arg8: memref<128x128xf32, #tpu.memory_space<vmem>>, %arg9: memref<1x128xf32, #tpu.memory_space<vmem>>, %arg10: memref<64x128xf32, #tpu.memory_space<vmem>>, %arg11: memref<128x128xf32, #tpu.memory_space<vmem>>, %arg12: memref<1x128xf32, #tpu.memory_space<vmem>>, %arg13: memref<128x128xf32, #tpu.memory_space<vmem>>, %arg14: memref<1x128xf32, #tpu.memory_space<vmem>>, %arg15: memref<128x64xf32, #tpu.memory_space<vmem>>, %arg16: memref<1x64xf32, #tpu.memory_space<vmem>>, %arg17: memref<8x128xf32, #tpu.memory_space<vmem>>) attributes {dimension_semantics = [#tpu.dimension_semantics<parallel>], iteration_bounds = array<i64: 1>, scalar_prefetch = 0 : i64, scratch_operands = 0 : i64, tpu.core_type = #tpu.core_type<tc>, window_params = [{transform_indices = @transform_0, window_bounds = array<i64: 8, 32>}, {transform_indices = @transform_1, window_bounds = array<i64: 8, 64>}, {transform_indices = @transform_2, window_bounds = array<i64: 8, 64>}, {pipeline_mode = #tpu.pipeline_mode<synchronous>, transform_indices = @transform_3, window_bounds = array<i64: 32, 64>}, {pipeline_mode = #tpu.pipeline_mode<synchronous>, transform_indices = @transform_4, window_bounds = array<i64: 1, 64>}, {pipeline_mode = #tpu.pipeline_mode<synchronous>, transform_indices = @transform_5, window_bounds = array<i64: 64, 128>}, {pipeline_mode = #tpu.pipeline_mode<synchronous>, transform_indices = @transform_6, window_bounds = array<i64: 1, 128>}, {pipeline_mode = #tpu.pipeline_mode<synchronous>, transform_indices = @transform_7, window_bounds = array<i64: 128, 128>}, {pipeline_mode = #tpu.pipeline_mode<synchronous>, transform_indices = @transform_8, window_bounds = array<i64: 1, 128>}, {pipeline_mode = #tpu.pipeline_mode<synchronous>, transform_indices = @transform_9, window_bounds = array<i64: 64, 128>}, {pipeline_mode = #tpu.pipeline_mode<synchronous>, transform_indices = @transform_10, window_bounds = array<i64: 128, 128>}, {pipeline_mode = #tpu.pipeline_mode<synchronous>, transform_indices = @transform_11, window_bounds = array<i64: 1, 128>}, {pipeline_mode = #tpu.pipeline_mode<synchronous>, transform_indices = @transform_12, window_bounds = array<i64: 128, 128>}, {pipeline_mode = #tpu.pipeline_mode<synchronous>, transform_indices = @transform_13, window_bounds = array<i64: 1, 128>}, {pipeline_mode = #tpu.pipeline_mode<synchronous>, transform_indices = @transform_14, window_bounds = array<i64: 128, 64>}, {pipeline_mode = #tpu.pipeline_mode<synchronous>, transform_indices = @transform_15, window_bounds = array<i64: 1, 64>}, {transform_indices = @transform_16, window_bounds = array<i64: 8, 128>}]} {
    %c0 = arith.constant 0 : index
    %c0_0 = arith.constant 0 : index
    %0 = vector.load %arg1[%c0, %c0_0] : memref<8x32xf32, #tpu.memory_space<vmem>>, vector<8x32xf32>
    %c0_1 = arith.constant 0 : index
    %c0_2 = arith.constant 0 : index
    %1 = vector.load %arg4[%c0_1, %c0_2] : memref<32x64xf32, #tpu.memory_space<vmem>>, vector<32x64xf32>
    %cst = arith.constant dense<0.000000e+00> : vector<8x64xf32>
    %2 = tpu.matmul %0, %1, %cst {dimension_numbers = #tpu.dot_dimension_numbers<[1], [0], [0], [1], [0, 0, 1, 1], [], []>} : vector<8x32xf32>, vector<32x64xf32>, vector<8x64xf32> -> vector<8x64xf32>
    %c0_3 = arith.constant 0 : index
    %c0_4 = arith.constant 0 : index
    %3 = vector.load %arg5[%c0_3, %c0_4] : memref<1x64xf32, #tpu.memory_space<vmem>>, vector<1x64xf32>
    %4 = vector.broadcast %3 : vector<1x64xf32> to vector<8x64xf32>
    %5 = arith.addf %2, %4 : vector<8x64xf32>
    %c0_5 = arith.constant 0 : index
    %c0_6 = arith.constant 0 : index
    %6 = vector.load %arg2[%c0_5, %c0_6] : memref<8x64xf32, #tpu.memory_space<vmem>>, vector<8x64xf32>
    %c0_7 = arith.constant 0 : index
    %c0_8 = arith.constant 0 : index
    %7 = vector.load %arg6[%c0_7, %c0_8] : memref<64x128xf32, #tpu.memory_space<vmem>>, vector<64x128xf32>
    %cst_9 = arith.constant dense<0.000000e+00> : vector<8x128xf32>
    %8 = tpu.matmul %6, %7, %cst_9 {dimension_numbers = #tpu.dot_dimension_numbers<[1], [0], [0], [1], [0, 0, 1, 1], [], []>} : vector<8x64xf32>, vector<64x128xf32>, vector<8x128xf32> -> vector<8x128xf32>
    %c0_10 = arith.constant 0 : index
    %c0_11 = arith.constant 0 : index
    %9 = vector.load %arg7[%c0_10, %c0_11] : memref<1x128xf32, #tpu.memory_space<vmem>>, vector<1x128xf32>
    %10 = vector.broadcast %9 : vector<1x128xf32> to vector<8x128xf32>
    %11 = arith.addf %8, %10 : vector<8x128xf32>
    %12 = arith.negf %11 : vector<8x128xf32>
    %13 = math.exp %12 : vector<8x128xf32>
    %cst_12 = arith.constant 1.000000e+00 : f32
    %14 = vector.broadcast %cst_12 : f32 to vector<8x128xf32>
    %15 = arith.addf %14, %13 : vector<8x128xf32>
    %16 = arith.divf %14, %15 : vector<8x128xf32>
    %17 = arith.mulf %11, %16 : vector<8x128xf32>
    %c0_13 = arith.constant 0 : index
    %c0_14 = arith.constant 0 : index
    %18 = vector.load %arg8[%c0_13, %c0_14] : memref<128x128xf32, #tpu.memory_space<vmem>>, vector<128x128xf32>
    %cst_15 = arith.constant dense<0.000000e+00> : vector<8x128xf32>
    %19 = tpu.matmul %17, %18, %cst_15 {dimension_numbers = #tpu.dot_dimension_numbers<[1], [0], [0], [1], [0, 0, 1, 1], [], []>} : vector<8x128xf32>, vector<128x128xf32>, vector<8x128xf32> -> vector<8x128xf32>
    %c0_16 = arith.constant 0 : index
    %c0_17 = arith.constant 0 : index
    %20 = vector.load %arg9[%c0_16, %c0_17] : memref<1x128xf32, #tpu.memory_space<vmem>>, vector<1x128xf32>
    %21 = vector.broadcast %20 : vector<1x128xf32> to vector<8x128xf32>
    %22 = arith.addf %19, %21 : vector<8x128xf32>
    %c0_18 = arith.constant 0 : index
    %c0_19 = arith.constant 0 : index
    %23 = vector.load %arg10[%c0_18, %c0_19] : memref<64x128xf32, #tpu.memory_space<vmem>>, vector<64x128xf32>
    %cst_20 = arith.constant dense<0.000000e+00> : vector<8x128xf32>
    %24 = tpu.matmul %5, %23, %cst_20 {dimension_numbers = #tpu.dot_dimension_numbers<[1], [0], [0], [1], [0, 0, 1, 1], [], []>} : vector<8x64xf32>, vector<64x128xf32>, vector<8x128xf32> -> vector<8x128xf32>
    %c0_21 = arith.constant 0 : index
    %c0_22 = arith.constant 0 : index
    %25 = vector.load %arg11[%c0_21, %c0_22] : memref<128x128xf32, #tpu.memory_space<vmem>>, vector<128x128xf32>
    %cst_23 = arith.constant dense<0.000000e+00> : vector<8x128xf32>
    %26 = tpu.matmul %22, %25, %cst_23 {dimension_numbers = #tpu.dot_dimension_numbers<[1], [0], [0], [1], [0, 0, 1, 1], [], []>} : vector<8x128xf32>, vector<128x128xf32>, vector<8x128xf32> -> vector<8x128xf32>
    %27 = arith.addf %24, %26 : vector<8x128xf32>
    %c0_24 = arith.constant 0 : index
    %c0_25 = arith.constant 0 : index
    %28 = vector.load %arg12[%c0_24, %c0_25] : memref<1x128xf32, #tpu.memory_space<vmem>>, vector<1x128xf32>
    %29 = vector.broadcast %28 : vector<1x128xf32> to vector<8x128xf32>
    %30 = arith.addf %27, %29 : vector<8x128xf32>
    %31 = arith.negf %30 : vector<8x128xf32>
    %32 = math.exp %31 : vector<8x128xf32>
    %cst_26 = arith.constant 1.000000e+00 : f32
    %33 = vector.broadcast %cst_26 : f32 to vector<8x128xf32>
    %34 = arith.addf %33, %32 : vector<8x128xf32>
    %35 = arith.divf %33, %34 : vector<8x128xf32>
    %36 = arith.mulf %30, %35 : vector<8x128xf32>
    %c0_27 = arith.constant 0 : index
    %c0_28 = arith.constant 0 : index
    %37 = vector.load %arg13[%c0_27, %c0_28] : memref<128x128xf32, #tpu.memory_space<vmem>>, vector<128x128xf32>
    %cst_29 = arith.constant dense<0.000000e+00> : vector<8x128xf32>
    %38 = tpu.matmul %36, %37, %cst_29 {dimension_numbers = #tpu.dot_dimension_numbers<[1], [0], [0], [1], [0, 0, 1, 1], [], []>} : vector<8x128xf32>, vector<128x128xf32>, vector<8x128xf32> -> vector<8x128xf32>
    %c0_30 = arith.constant 0 : index
    %c0_31 = arith.constant 0 : index
    %39 = vector.load %arg14[%c0_30, %c0_31] : memref<1x128xf32, #tpu.memory_space<vmem>>, vector<1x128xf32>
    %40 = vector.broadcast %39 : vector<1x128xf32> to vector<8x128xf32>
    %41 = arith.addf %38, %40 : vector<8x128xf32>
    %42 = arith.negf %41 : vector<8x128xf32>
    %43 = math.exp %42 : vector<8x128xf32>
    %cst_32 = arith.constant 1.000000e+00 : f32
    %44 = vector.broadcast %cst_32 : f32 to vector<8x128xf32>
    %45 = arith.addf %44, %43 : vector<8x128xf32>
    %46 = arith.divf %44, %45 : vector<8x128xf32>
    %47 = arith.mulf %41, %46 : vector<8x128xf32>
    %c0_33 = arith.constant 0 : index
    %c0_34 = arith.constant 0 : index
    %48 = vector.load %arg15[%c0_33, %c0_34] : memref<128x64xf32, #tpu.memory_space<vmem>>, vector<128x64xf32>
    %cst_35 = arith.constant dense<0.000000e+00> : vector<8x64xf32>
    %49 = tpu.matmul %47, %48, %cst_35 {dimension_numbers = #tpu.dot_dimension_numbers<[1], [0], [0], [1], [0, 0, 1, 1], [], []>} : vector<8x128xf32>, vector<128x64xf32>, vector<8x64xf32> -> vector<8x64xf32>
    %c0_36 = arith.constant 0 : index
    %c0_37 = arith.constant 0 : index
    %50 = vector.load %arg16[%c0_36, %c0_37] : memref<1x64xf32, #tpu.memory_space<vmem>>, vector<1x64xf32>
    %51 = vector.broadcast %50 : vector<1x64xf32> to vector<8x64xf32>
    %52 = arith.addf %49, %51 : vector<8x64xf32>
    %c0_38 = arith.constant 0 : index
    %c0_39 = arith.constant 0 : index
    %53 = vector.load %arg3[%c0_38, %c0_39] : memref<8x64xf32, #tpu.memory_space<vmem>>, vector<8x64xf32>
    %54 = arith.subf %52, %53 : vector<8x64xf32>
    %55 = arith.mulf %54, %54 : vector<8x64xf32>
    %56 = vector.shape_cast %55 : vector<8x64xf32> to vector<1x8x64xf32>
    %cst_40 = arith.constant dense<0.000000e+00> : vector<1xf32>
    %57 = vector.multi_reduction <add>, %56, %cst_40 [1, 2] : vector<1x8x64xf32> to vector<1xf32>
    %58 = vector.shape_cast %57 : vector<1xf32> to vector<1x1x1xf32>
    %59 = vector.extract %58[0, 0, 0] : f32 from vector<1x1x1xf32>
    %60 = vector.broadcast %59 : f32 to vector<8x128xf32>
    %c0_41 = arith.constant 0 : index
    %c0_42 = arith.constant 0 : index
    %61 = vector.load %arg17[%c0_41, %c0_42] : memref<8x128xf32, #tpu.memory_space<vmem>>, vector<8x128xf32>
    tpu.vector_store %arg17[%c0_41, %c0_42], %60 {strides = array<i32>} : memref<8x128xf32, #tpu.memory_space<vmem>>, vector<8x128xf32>,
    return
  }
  func.func @transform_0(%arg0: i32) -> (i32, i32) {
    %c0_i32 = arith.constant 0 : i32
    %c0_i32_0 = arith.constant 0 : i32
    return %arg0, %c0_i32 : i32, i32
  }
  func.func @transform_1(%arg0: i32) -> (i32, i32) {
    %c0_i32 = arith.constant 0 : i32
    %c0_i32_0 = arith.constant 0 : i32
    return %arg0, %c0_i32 : i32, i32
  }
  func.func @transform_2(%arg0: i32) -> (i32, i32) {
    %c0_i32 = arith.constant 0 : i32
    %c0_i32_0 = arith.constant 0 : i32
    return %arg0, %c0_i32 : i32, i32
  }
  func.func @transform_3(%arg0: i32) -> (i32, i32) {
    %c0_i32 = arith.constant 0 : i32
    %c0_i32_0 = arith.constant 0 : i32
    %c0_i32_1 = arith.constant 0 : i32
    return %c0_i32, %c0_i32_0 : i32, i32
  }
  func.func @transform_4(%arg0: i32) -> (i32, i32) {
    %c0_i32 = arith.constant 0 : i32
    %c0_i32_0 = arith.constant 0 : i32
    %c0_i32_1 = arith.constant 0 : i32
    return %c0_i32, %c0_i32_0 : i32, i32
  }
  func.func @transform_5(%arg0: i32) -> (i32, i32) {
    %c0_i32 = arith.constant 0 : i32
    %c0_i32_0 = arith.constant 0 : i32
    %c0_i32_1 = arith.constant 0 : i32
    return %c0_i32, %c0_i32_0 : i32, i32
  }
  func.func @transform_6(%arg0: i32) -> (i32, i32) {
    %c0_i32 = arith.constant 0 : i32
    %c0_i32_0 = arith.constant 0 : i32
    %c0_i32_1 = arith.constant 0 : i32
    return %c0_i32, %c0_i32_0 : i32, i32
  }
  func.func @transform_7(%arg0: i32) -> (i32, i32) {
    %c0_i32 = arith.constant 0 : i32
    %c0_i32_0 = arith.constant 0 : i32
    %c0_i32_1 = arith.constant 0 : i32
    return %c0_i32, %c0_i32_0 : i32, i32
  }
  func.func @transform_8(%arg0: i32) -> (i32, i32) {
    %c0_i32 = arith.constant 0 : i32
    %c0_i32_0 = arith.constant 0 : i32
    %c0_i32_1 = arith.constant 0 : i32
    return %c0_i32, %c0_i32_0 : i32, i32
  }
  func.func @transform_9(%arg0: i32) -> (i32, i32) {
    %c0_i32 = arith.constant 0 : i32
    %c0_i32_0 = arith.constant 0 : i32
    %c0_i32_1 = arith.constant 0 : i32
    return %c0_i32, %c0_i32_0 : i32, i32
  }
  func.func @transform_10(%arg0: i32) -> (i32, i32) {
    %c0_i32 = arith.constant 0 : i32
    %c0_i32_0 = arith.constant 0 : i32
    %c0_i32_1 = arith.constant 0 : i32
    return %c0_i32, %c0_i32_0 : i32, i32
  }
  func.func @transform_11(%arg0: i32) -> (i32, i32) {
    %c0_i32 = arith.constant 0 : i32
    %c0_i32_0 = arith.constant 0 : i32
    %c0_i32_1 = arith.constant 0 : i32
    return %c0_i32, %c0_i32_0 : i32, i32
  }
  func.func @transform_12(%arg0: i32) -> (i32, i32) {
    %c0_i32 = arith.constant 0 : i32
    %c0_i32_0 = arith.constant 0 : i32
    %c0_i32_1 = arith.constant 0 : i32
    return %c0_i32, %c0_i32_0 : i32, i32
  }
  func.func @transform_13(%arg0: i32) -> (i32, i32) {
    %c0_i32 = arith.constant 0 : i32
    %c0_i32_0 = arith.constant 0 : i32
    %c0_i32_1 = arith.constant 0 : i32
    return %c0_i32, %c0_i32_0 : i32, i32
  }
  func.func @transform_14(%arg0: i32) -> (i32, i32) {
    %c0_i32 = arith.constant 0 : i32
    %c0_i32_0 = arith.constant 0 : i32
    %c0_i32_1 = arith.constant 0 : i32
    return %c0_i32, %c0_i32_0 : i32, i32
  }
  func.func @transform_15(%arg0: i32) -> (i32, i32) {
    %c0_i32 = arith.constant 0 : i32
    %c0_i32_0 = arith.constant 0 : i32
    %c0_i32_1 = arith.constant 0 : i32
    return %c0_i32, %c0_i32_0 : i32, i32
  }
  func.func @transform_16(%arg0: i32) -> (i32, i32) {
    %c0_i32 = arith.constant 0 : i32
    %c0_i32_0 = arith.constant 0 : i32
    return %c0_i32, %arg0 : i32, i32
  }
}

</mosaic_0001>

<llo_original>
// kernel: tpu_custom_call.1
$region0: #{tpu_custom_call.1}
  #allocation0 [shape = 'u32[]', space=smem, size = 0x4, offset = 0x4, fixed_abs, tag = 'smem constant byte address 0x4 - core index']
  #allocation1 [shape = 'u32[72,128]{1,0:T(1,128)}', space=vmem, size = 0x9000, scoped, tag = 'internal scratch']
  %s0 = inlined_call_operand.hbm [shape: f32[8,32], index: 0, kind: input, shape index: {}]
  %s1 = inlined_call_operand.hbm [shape: f32[8,64], index: 1, kind: input, shape index: {}]
  %s2 = inlined_call_operand.hbm [shape: f32[8,64], index: 2, kind: input, shape index: {}]
  %s3 = inlined_call_operand.hbm [shape: f32[32,64], index: 3, kind: input, shape index: {}]
  %s4 = inlined_call_operand.vmem [shape: f32[1,64], index: 4, kind: input, shape index: {}]
  %s5 = inlined_call_operand.vmem [shape: f32[64,128], index: 5, kind: input, shape index: {}]
  %s6 = inlined_call_operand.vmem [shape: f32[1,128], index: 6, kind: input, shape index: {}]
  %s7 = inlined_call_operand.vmem [shape: f32[128,128], index: 7, kind: input, shape index: {}]
  %s8 = inlined_call_operand.vmem [shape: f32[1,128], index: 8, kind: input, shape index: {}]
  %s9 = inlined_call_operand.hbm [shape: f32[64,128], index: 9, kind: input, shape index: {}]
  %s10 = inlined_call_operand.hbm [shape: f32[128,128], index: 10, kind: input, shape index: {}]
  %s11 = inlined_call_operand.vmem [shape: f32[1,128], index: 11, kind: input, shape index: {}]
  %s12 = inlined_call_operand.hbm [shape: f32[128,128], index: 12, kind: input, shape index: {}]
  %s13 = inlined_call_operand.vmem [shape: f32[1,128], index: 13, kind: input, shape index: {}]
  %s14 = inlined_call_operand.vmem [shape: f32[128,64], index: 14, kind: input, shape index: {}]
  %s15 = inlined_call_operand.vmem [shape: f32[1,64], index: 15, kind: input, shape index: {}]
  %s16 = inlined_call_operand.hbm [shape: f32[8,128], index: 16, kind: output, shape index: {}]
  %s17 = sld [smem:[#allocation0]]
  $region102: #{tpu_custom_call.1} parent=0
    _
  %s19 = ssub.s32 1, %s17
  %s20 = scalar_select 0, %s19, %s17
  $region1: #{tpu_custom_call.1} parent=0
    #allocation2 [shape = 'u8[4096]{0}', space=vmem, size = 0x1000, scoped, tag = 'input window, operand 0, single buffered']
    #allocation3 [shape = 's32[1]{0}', space=sflag, size = 0x4, scoped, tag = 'scoped memory for tpu_custom_call.1']
    #allocation4 [shape = 's32[1]{0}', space=sflag, size = 0x4, scoped, tag = 'scoped memory for tpu_custom_call.1']
    #allocation5 [shape = 'u8[4096]{0}', space=vmem, size = 0x1000, scoped, tag = 'input window, operand 1, single buffered']
    #allocation6 [shape = 's32[1]{0}', space=sflag, size = 0x4, scoped, tag = 'scoped memory for tpu_custom_call.1']
    #allocation7 [shape = 'u8[4096]{0}', space=vmem, size = 0x1000, scoped, tag = 'input window, operand 2, single buffered']
    #allocation8 [shape = 'u8[16384]{0}', space=vmem, size = 0x4000, scoped, tag = 'input window, operand 3, single buffered']
    #allocation9 [shape = 's32[1]{0}', space=sflag, size = 0x4, scoped, tag = 'scoped memory for tpu_custom_call.1']
    #allocation10 [shape = 'u8[32768]{0}', space=vmem, size = 0x8000, scoped, tag = 'input window, operand 9, single buffered']
    #allocation11 [shape = 'u8[65536]{0}', space=vmem, size = 0x10000, scoped, tag = 'input window, operand 10, single buffered']
    #allocation12 [shape = 's32[1]{0}', space=sflag, size = 0x4, scoped, tag = 'scoped memory for tpu_custom_call.1']
    #allocation13 [shape = 'u8[65536]{0}', space=vmem, size = 0x10000, scoped, tag = 'input window, operand 12, single buffered']
    #allocation14 [shape = 'u8[4096]{0}', space=vmem, size = 0x1000, scoped, tag = 'output window, operand 0, single buffered']
    %21 = vsyncpa [#allocation3], 0
    %22 = vsyncpa [#allocation6], 0
    %23 = vsyncpa [#allocation9], 0
    %24 = vsyncpa [#allocation12], 0
    %25 = vsyncpa [#allocation4], 0
    // Predicated region
    $region2: #{tpu_custom_call.1} parent=1 // pred_check
      _
    $region3: #{tpu_custom_call.1} parent=1 // pred_check_branch
      %27 = sbr.rel (0) target = $region5
    $region4: #{tpu_custom_call.1} parent=1 // pred_region
      %29 = vsyncadd [#allocation3], 0
      %s31 = sshll.u32 %s0, 4
      %s32 = int_to_ptr.hbm [resolvable:$true] %s31
      %s33 = sshll.u32 [#allocation2], 4
      %s34 = int_to_ptr.vmem [resolvable:$true] %s33
      %36 = dma.hbm_to_vmem [thread:$0]  %s32, 128, %s34, [#allocation3]
    $region5: #{tpu_custom_call.1} parent=1 // pred_fallthru
      _
    // Predicated region
    $region6: #{tpu_custom_call.1} parent=1 // pred_check
      _
    $region7: #{tpu_custom_call.1} parent=1 // pred_check_branch
      %38 = sbr.rel (0) target = $region9
    $region8: #{tpu_custom_call.1} parent=1 // pred_region
      %40 = vsyncadd [#allocation6], 0
      %s42 = sshll.u32 %s1, 4
      %s43 = int_to_ptr.hbm [resolvable:$true] %s42
      %s44 = sshll.u32 [#allocation5], 4
      %s45 = int_to_ptr.vmem [resolvable:$true] %s44
      %47 = dma.hbm_to_vmem [thread:$0]  %s43, 128, %s45, [#allocation6]
    $region9: #{tpu_custom_call.1} parent=1 // pred_fallthru
      _
    // Predicated region
    $region10: #{tpu_custom_call.1} parent=1 // pred_check
      _
    $region11: #{tpu_custom_call.1} parent=1 // pred_check_branch
      %49 = sbr.rel (0) target = $region13
    $region12: #{tpu_custom_call.1} parent=1 // pred_region
      %51 = vsyncadd [#allocation6], 0
      %s53 = sshll.u32 %s2, 4
      %s54 = int_to_ptr.hbm [resolvable:$true] %s53
      %s55 = sshll.u32 [#allocation7], 4
      %s56 = int_to_ptr.vmem [resolvable:$true] %s55
      %58 = dma.hbm_to_vmem [thread:$0]  %s54, 128, %s56, [#allocation6]
    $region13: #{tpu_custom_call.1} parent=1 // pred_fallthru
      _
    // Predicated region
    $region14: #{tpu_custom_call.1} parent=1 // pred_check
      _
    $region15: #{tpu_custom_call.1} parent=1 // pred_check_branch
      %60 = sbr.rel (0) target = $region17
    $region16: #{tpu_custom_call.1} parent=1 // pred_region
      %62 = vsyncadd [#allocation9], 0
      %s63 = sshll.u32 %s3, 4
      %s64 = int_to_ptr.hbm [resolvable:$true] %s63
      %s65 = sshll.u32 [#allocation8], 4
      %s66 = int_to_ptr.vmem [resolvable:$true] %s65
      %71 = dma.hbm_to_vmem [thread:$0]  %s64, 512, %s66, [#allocation9], 128, 128, 8
    $region17: #{tpu_custom_call.1} parent=1 // pred_fallthru
      _
    // Predicated region
    $region18: #{tpu_custom_call.1} parent=1 // pred_check
      _
    $region19: #{tpu_custom_call.1} parent=1 // pred_check_branch
      %73 = sbr.rel (0) target = $region21
    $region20: #{tpu_custom_call.1} parent=1 // pred_region
      _
    $region21: #{tpu_custom_call.1} parent=1 // pred_fallthru
      _
    // Predicated region
    $region22: #{tpu_custom_call.1} parent=1 // pred_check
      _
    $region23: #{tpu_custom_call.1} parent=1 // pred_check_branch
      %75 = sbr.rel (0) target = $region25
    $region24: #{tpu_custom_call.1} parent=1 // pred_region
      _
    $region25: #{tpu_custom_call.1} parent=1 // pred_fallthru
      _
    // Predicated region
    $region26: #{tpu_custom_call.1} parent=1 // pred_check
      _
    $region27: #{tpu_custom_call.1} parent=1 // pred_check_branch
      %77 = sbr.rel (0) target = $region29
    $region28: #{tpu_custom_call.1} parent=1 // pred_region
      _
    $region29: #{tpu_custom_call.1} parent=1 // pred_fallthru
      _
    // Predicated region
    $region30: #{tpu_custom_call.1} parent=1 // pred_check
      _
    $region31: #{tpu_custom_call.1} parent=1 // pred_check_branch
      %79 = sbr.rel (0) target = $region33
    $region32: #{tpu_custom_call.1} parent=1 // pred_region
      _
    $region33: #{tpu_custom_call.1} parent=1 // pred_fallthru
      _
    // Predicated region
    $region34: #{tpu_custom_call.1} parent=1 // pred_check
      _
    $region35: #{tpu_custom_call.1} parent=1 // pred_check_branch
      %81 = sbr.rel (0) target = $region37
    $region36: #{tpu_custom_call.1} parent=1 // pred_region
      _
    $region37: #{tpu_custom_call.1} parent=1 // pred_fallthru
      _
    // Predicated region
    $region38: #{tpu_custom_call.1} parent=1 // pred_check
      _
    $region39: #{tpu_custom_call.1} parent=1 // pred_check_branch
      %83 = sbr.rel (0) target = $region41
    $region40: #{tpu_custom_call.1} parent=1 // pred_region
      %85 = vsyncadd [#allocation9], 0
      %s86 = sshll.u32 %s9, 4
      %s87 = int_to_ptr.hbm [resolvable:$true] %s86
      %s88 = sshll.u32 [#allocation10], 4
      %s89 = int_to_ptr.vmem [resolvable:$true] %s88
      %94 = dma.hbm_to_vmem [thread:$0]  %s87, 1024, %s89, [#allocation9], 128, 128, 8
    $region41: #{tpu_custom_call.1} parent=1 // pred_fallthru
      _
    // Predicated region
    $region42: #{tpu_custom_call.1} parent=1 // pred_check
      _
    $region43: #{tpu_custom_call.1} parent=1 // pred_check_branch
      %96 = sbr.rel (0) target = $region45
    $region44: #{tpu_custom_call.1} parent=1 // pred_region
      %98 = vsyncadd [#allocation12], 0
      %s99 = sshll.u32 %s10, 4
      %s100 = int_to_ptr.hbm [resolvable:$true] %s99
      %s101 = sshll.u32 [#allocation11], 4
      %s102 = int_to_ptr.vmem [resolvable:$true] %s101
      %107 = dma.hbm_to_vmem [thread:$0]  %s100, 2048, %s102, [#allocation12], 128, 128, 8
    $region45: #{tpu_custom_call.1} parent=1 // pred_fallthru
      _
    // Predicated region
    $region46: #{tpu_custom_call.1} parent=1 // pred_check
      _
    $region47: #{tpu_custom_call.1} parent=1 // pred_check_branch
      %109 = sbr.rel (0) target = $region49
    $region48: #{tpu_custom_call.1} parent=1 // pred_region
      _
    $region49: #{tpu_custom_call.1} parent=1 // pred_fallthru
      _
    // Predicated region
    $region50: #{tpu_custom_call.1} parent=1 // pred_check
      _
    $region51: #{tpu_custom_call.1} parent=1 // pred_check_branch
      %111 = sbr.rel (0) target = $region53
    $region52: #{tpu_custom_call.1} parent=1 // pred_region
      %113 = vsyncadd [#allocation12], 0
      %s114 = sshll.u32 %s12, 4
      %s115 = int_to_ptr.hbm [resolvable:$true] %s114
      %s116 = sshll.u32 [#allocation13], 4
      %s117 = int_to_ptr.vmem [resolvable:$true] %s116
      %122 = dma.hbm_to_vmem [thread:$0]  %s115, 2048, %s117, [#allocation12], 128, 128, 8
    $region53: #{tpu_custom_call.1} parent=1 // pred_fallthru
      _
    // Predicated region
    $region54: #{tpu_custom_call.1} parent=1 // pred_check
      _
    $region55: #{tpu_custom_call.1} parent=1 // pred_check_branch
      %124 = sbr.rel (0) target = $region57
    $region56: #{tpu_custom_call.1} parent=1 // pred_region
      _
    $region57: #{tpu_custom_call.1} parent=1 // pred_fallthru
      _
    // Predicated region
    $region58: #{tpu_custom_call.1} parent=1 // pred_check
      _
    $region59: #{tpu_custom_call.1} parent=1 // pred_check_branch
      %126 = sbr.rel (0) target = $region61
    $region60: #{tpu_custom_call.1} parent=1 // pred_region
      _
    $region61: #{tpu_custom_call.1} parent=1 // pred_fallthru
      _
    // Predicated region
    $region62: #{tpu_custom_call.1} parent=1 // pred_check
      _
    $region63: #{tpu_custom_call.1} parent=1 // pred_check_branch
      %128 = sbr.rel (0) target = $region65
    $region64: #{tpu_custom_call.1} parent=1 // pred_region
      _
    $region65: #{tpu_custom_call.1} parent=1 // pred_fallthru
      _
    // Predicated region
    $region66: #{tpu_custom_call.1} parent=1 // pred_check
      _
    $region67: #{tpu_custom_call.1} parent=1 // pred_check_branch
      %130 = sbr.rel (0) target = $region69
    $region68: #{tpu_custom_call.1} parent=1 // pred_region
      %132 = dma.done [#allocation3], 128
    $region69: #{tpu_custom_call.1} parent=1 // pred_fallthru
      _
    // Predicated region
    $region70: #{tpu_custom_call.1} parent=1 // pred_check
      _
    $region71: #{tpu_custom_call.1} parent=1 // pred_check_branch
      %134 = sbr.rel (0) target = $region73
    $region72: #{tpu_custom_call.1} parent=1 // pred_region
      %136 = dma.done [#allocation6], 128
    $region73: #{tpu_custom_call.1} parent=1 // pred_fallthru
      _
    // Predicated region
    $region74: #{tpu_custom_call.1} parent=1 // pred_check
      _
    $region75: #{tpu_custom_call.1} parent=1 // pred_check_branch
      %138 = sbr.rel (0) target = $region77
    $region76: #{tpu_custom_call.1} parent=1 // pred_region
      %140 = dma.done [#allocation6], 128
    $region77: #{tpu_custom_call.1} parent=1 // pred_fallthru
      _
    // Predicated region
    $region78: #{tpu_custom_call.1} parent=1 // pred_check
      _
    $region79: #{tpu_custom_call.1} parent=1 // pred_check_branch
      %142 = sbr.rel (0) target = $region81
    $region80: #{tpu_custom_call.1} parent=1 // pred_region
      %144 = dma.done [#allocation9], 512
    $region81: #{tpu_custom_call.1} parent=1 // pred_fallthru
      _
    // Predicated region
    $region82: #{tpu_custom_call.1} parent=1 // pred_check
      _
    $region83: #{tpu_custom_call.1} parent=1 // pred_check_branch
      %146 = sbr.rel (0) target = $region85
    $region84: #{tpu_custom_call.1} parent=1 // pred_region
      %148 = dma.done [#allocation9], 1024
    $region85: #{tpu_custom_call.1} parent=1 // pred_fallthru
      _
    // Predicated region
    $region86: #{tpu_custom_call.1} parent=1 // pred_check
      _
    $region87: #{tpu_custom_call.1} parent=1 // pred_check_branch
      %150 = sbr.rel (0) target = $region89
    $region88: #{tpu_custom_call.1} parent=1 // pred_region
      %152 = dma.done [#allocation12], 2048
    $region89: #{tpu_custom_call.1} parent=1 // pred_fallthru
      _
    // Predicated region
    $region90: #{tpu_custom_call.1} parent=1 // pred_check
      _
    $region91: #{tpu_custom_call.1} parent=1 // pred_check_branch
      %154 = sbr.rel (0) target = $region93
    $region92: #{tpu_custom_call.1} parent=1 // pred_region
      %156 = dma.done [#allocation12], 2048
    $region93: #{tpu_custom_call.1} parent=1 // pred_fallthru
      _
    %v157 = vld [vmem:[#allocation2] sm:$0xff]
    %v158 = vld [vmem:[#allocation8] sm:$0xff]
    %v159 = vld [vmem:[#allocation8 + $0x8] sm:$0xff]
    %v160 = vld [vmem:[#allocation8 + $0x10] sm:$0xff]
    %v161 = vld [vmem:[#allocation8 + $0x18] sm:$0xff]
    %v162 = vld [vmem:[%s4] sm:$0x1]
    %v164 = vperm.slane %v162, 0
    %vm166 = vcmask 261120
    %v168 = vsel %vm166, %v157, 0
    %170 = vmatpush.msra.mxu0 0.0
    %171 = vmatpush.msra.mxu0 0.0
    %172 = vmatpush.msra.mxu0 0.0
    %173 = vmatpush.msra.mxu0 0.0
    %174 = vmatpush.msra.mxu0 0.0
    %175 = vmatpush.msra.mxu0 0.0
    %176 = vmatpush.msra.mxu0 0.0
    %177 = vmatpush.msra.mxu0 0.0
    %178 = vmatpush.msra.mxu0 0.0
    %179 = vmatpush.msra.mxu0 0.0
    %180 = vmatpush.msra.mxu0 0.0
    %181 = vmatpush.msra.mxu0 0.0
    %182 = vmatpush.msra.mxu0 %v161
    %183 = vmatpush.msra.mxu0 %v160
    %184 = vmatpush.msra.mxu0 %v159
    %185 = vmatpush.msra.mxu0 %v158
    %186 = vmatmul.f32.gmra.mxu0 %v168
    %v187 = vpop.f32.mrf.mxu0
    %v188 = vadd.f32 %v164, %v187
    %189 = vdwg.mxu0
    %v190 = vld [vmem:[#allocation5] sm:$0xff]
    %v191 = vld [vmem:[%s5] sm:$0xff]
    %v192 = vld [vmem:[%s5 + $0x8] sm:$0xff]
    %v193 = vld [vmem:[%s5 + $0x10] sm:$0xff]
    %v194 = vld [vmem:[%s5 + $0x18] sm:$0xff]
    %v195 = vld [vmem:[%s5 + $0x20] sm:$0xff]
    %v196 = vld [vmem:[%s5 + $0x28] sm:$0xff]
    %v197 = vld [vmem:[%s5 + $0x30] sm:$0xff]
    %v198 = vld [vmem:[%s5 + $0x38] sm:$0xff]
    %v199 = vld [vmem:[%s6] sm:$0x1]
    %v201 = vperm.slane %v199, 0
    %vm203 = vcmask 523264
    %v205 = vsel %vm203, %v190, 0
    %207 = vmatpush.msra.mxu0 0.0
    %208 = vmatpush.msra.mxu0 0.0
    %209 = vmatpush.msra.mxu0 0.0
    %210 = vmatpush.msra.mxu0 0.0
    %211 = vmatpush.msra.mxu0 0.0
    %212 = vmatpush.msra.mxu0 0.0
    %213 = vmatpush.msra.mxu0 0.0
    %214 = vmatpush.msra.mxu0 0.0
    %215 = vmatpush.msra.mxu0 %v198
    %216 = vmatpush.msra.mxu0 %v197
    %217 = vmatpush.msra.mxu0 %v196
    %218 = vmatpush.msra.mxu0 %v195
    %219 = vmatpush.msra.mxu0 %v194
    %220 = vmatpush.msra.mxu0 %v193
    %221 = vmatpush.msra.mxu0 %v192
    %222 = vmatpush.msra.mxu0 %v191
    %223 = vmatmul.f32.gmra.mxu0 %v205
    %v224 = vpop.f32.mrf.mxu0
    %v225 = vadd.f32 %v201, %v224
    %226 = vdwg.mxu0
    %v227 = vxor.u32 %v225, 2147483648
    %v228 = vmul.f32 %v227, 1.442695
    %v229 = vpow.pop %v228
    %v230 = vadd.f32 %v229, 1.0
    %v231 = vrcp.pop %v230
    %v232 = vmul.f32 %v230, %v231
    %v233 = vsub.f32 1.0, %v232
    %v234 = vmul.f32 %v231, %v233
    %v235 = vadd.f32 %v231, %v234
    %vm236 = vweird.f32 %v230
    %vm237 = vweird.f32 %v231
    %vm238 = vmor %vm236, %vm237
    %v239 = vsel %vm238, %v231, %v235
    %v240 = vand.u32 2147483647, %v230
    %vm241 = vcmp.eq.f32.partialorder %v240, 8.507059e+37
    %v242 = vand.u32 %v230, 2147483648
    %v243 = vor.u32 1.1754944e-38, %v242
    %v244 = vsel %vm241, %v243, %v239
    %v245 = vmul.f32 1.0, %v244
    %v246 = vmul.f32 %v225, %v245
    %v247 = vld [vmem:[%s7] sm:$0xff]
    %v248 = vld [vmem:[%s7 + $0x8] sm:$0xff]
    %v249 = vld [vmem:[%s7 + $0x10] sm:$0xff]
    %v250 = vld [vmem:[%s7 + $0x18] sm:$0xff]
    %v251 = vld [vmem:[%s7 + $0x20] sm:$0xff]
    %v252 = vld [vmem:[%s7 + $0x28] sm:$0xff]
    %v253 = vld [vmem:[%s7 + $0x30] sm:$0xff]
    %v254 = vld [vmem:[%s7 + $0x38] sm:$0xff]
    %v255 = vld [vmem:[%s7 + $0x40] sm:$0xff]
    %v256 = vld [vmem:[%s7 + $0x48] sm:$0xff]
    %v257 = vld [vmem:[%s7 + $0x50] sm:$0xff]
    %v258 = vld [vmem:[%s7 + $0x58] sm:$0xff]
    %v259 = vld [vmem:[%s7 + $0x60] sm:$0xff]
    %v260 = vld [vmem:[%s7 + $0x68] sm:$0xff]
    %v261 = vld [vmem:[%s7 + $0x70] sm:$0xff]
    %v262 = vld [vmem:[%s7 + $0x78] sm:$0xff]
    %v263 = vld [vmem:[%s8] sm:$0x1]
    %v265 = vperm.slane %v263, 0
    %267 = vmatpush.msra.mxu0 %v262
    %268 = vmatpush.msra.mxu0 %v261
    %269 = vmatpush.msra.mxu0 %v260
    %270 = vmatpush.msra.mxu0 %v259
    %271 = vmatpush.msra.mxu0 %v258
    %272 = vmatpush.msra.mxu0 %v257
    %273 = vmatpush.msra.mxu0 %v256
    %274 = vmatpush.msra.mxu0 %v255
    %275 = vmatpush.msra.mxu0 %v254
    %276 = vmatpush.msra.mxu0 %v253
    %277 = vmatpush.msra.mxu0 %v252
    %278 = vmatpush.msra.mxu0 %v251
    %279 = vmatpush.msra.mxu0 %v250
    %280 = vmatpush.msra.mxu0 %v249
    %281 = vmatpush.msra.mxu0 %v248
    %282 = vmatpush.msra.mxu0 %v247
    %283 = vmatmul.f32.gmra.mxu0 %v246
    %v284 = vpop.f32.mrf.mxu0
    %v285 = vadd.f32 %v265, %v284
    %286 = vdwg.mxu0
    %v287 = vld [vmem:[#allocation10] sm:$0xff]
    %v288 = vld [vmem:[#allocation10 + $0x8] sm:$0xff]
    %v289 = vld [vmem:[#allocation10 + $0x10] sm:$0xff]
    %v290 = vld [vmem:[#allocation10 + $0x18] sm:$0xff]
    %v291 = vld [vmem:[#allocation10 + $0x20] sm:$0xff]
    %v292 = vld [vmem:[#allocation10 + $0x28] sm:$0xff]
    %v293 = vld [vmem:[#allocation10 + $0x30] sm:$0xff]
    %v294 = vld [vmem:[#allocation10 + $0x38] sm:$0xff]
    %v295 = vld [vmem:[#allocation11] sm:$0xff]
    %v296 = vld [vmem:[#allocation11 + $0x8] sm:$0xff]
    %v297 = vld [vmem:[#allocation11 + $0x10] sm:$0xff]
    %v298 = vld [vmem:[#allocation11 + $0x18] sm:$0xff]
    %v299 = vld [vmem:[#allocation11 + $0x20] sm:$0xff]
    %v300 = vld [vmem:[#allocation11 + $0x28] sm:$0xff]
    %v301 = vld [vmem:[#allocation11 + $0x30] sm:$0xff]
    %v302 = vld [vmem:[#allocation11 + $0x38] sm:$0xff]
    %v303 = vld [vmem:[#allocation11 + $0x40] sm:$0xff]
    %v304 = vld [vmem:[#allocation11 + $0x48] sm:$0xff]
    %v305 = vld [vmem:[#allocation11 + $0x50] sm:$0xff]
    %v306 = vld [vmem:[#allocation11 + $0x58] sm:$0xff]
    %v307 = vld [vmem:[#allocation11 + $0x60] sm:$0xff]
    %v308 = vld [vmem:[#allocation11 + $0x68] sm:$0xff]
    %v309 = vld [vmem:[#allocation11 + $0x70] sm:$0xff]
    %v310 = vld [vmem:[#allocation11 + $0x78] sm:$0xff]
    %311 = vmatpush.msra.mxu0 %v310
    %312 = vmatpush.msra.mxu0 %v309
    %313 = vmatpush.msra.mxu0 %v308
    %314 = vmatpush.msra.mxu0 %v307
    %315 = vmatpush.msra.mxu0 %v306
    %316 = vmatpush.msra.mxu0 %v305
    %317 = vmatpush.msra.mxu0 %v304
    %318 = vmatpush.msra.mxu0 %v303
    %319 = vmatpush.msra.mxu0 %v302
    %320 = vmatpush.msra.mxu0 %v301
    %321 = vmatpush.msra.mxu0 %v300
    %322 = vmatpush.msra.mxu0 %v299
    %323 = vmatpush.msra.mxu0 %v298
    %324 = vmatpush.msra.mxu0 %v297
    %325 = vmatpush.msra.mxu0 %v296
    %326 = vmatpush.msra.mxu0 %v295
    %327 = vmatmul.f32.gmra.mxu0 %v285
    %v328 = vpop.f32.mrf.mxu0
    %v329 = vadd.f32 0.0, %v328
    %330 = vdwg.mxu0
    %v332 = vsel %vm203, %v188, 0
    %334 = vmatpush.msra.mxu0 0.0
    %335 = vmatpush.msra.mxu0 0.0
    %336 = vmatpush.msra.mxu0 0.0
    %337 = vmatpush.msra.mxu0 0.0
    %338 = vmatpush.msra.mxu0 0.0
    %339 = vmatpush.msra.mxu0 0.0
    %340 = vmatpush.msra.mxu0 0.0
    %341 = vmatpush.msra.mxu0 0.0
    %342 = vmatpush.msra.mxu0 %v294
    %343 = vmatpush.msra.mxu0 %v293
    %344 = vmatpush.msra.mxu0 %v292
    %345 = vmatpush.msra.mxu0 %v291
    %346 = vmatpush.msra.mxu0 %v290
    %347 = vmatpush.msra.mxu0 %v289
    %348 = vmatpush.msra.mxu0 %v288
    %349 = vmatpush.msra.mxu0 %v287
    %350 = vmatmul.f32.gmra.mxu0 %v332
    %v351 = vpop.f32.mrf.mxu0
    %v352 = vadd.f32 %v329, %v351
    %353 = vdwg.mxu0
    %v354 = vld [vmem:[%s11] sm:$0x1]
    %v356 = vperm.slane %v354, 0
    %v358 = vadd.f32 %v352, %v356
    %v359 = vxor.u32 %v358, 2147483648
    %v360 = vmul.f32 %v359, 1.442695
    %v361 = vpow.pop %v360
    %v362 = vadd.f32 %v361, 1.0
    %v363 = vrcp.pop %v362
    %v364 = vmul.f32 %v362, %v363
    %v365 = vsub.f32 1.0, %v364
    %v366 = vmul.f32 %v363, %v365
    %v367 = vadd.f32 %v363, %v366
    %vm368 = vweird.f32 %v362
    %vm369 = vweird.f32 %v363
    %vm370 = vmor %vm368, %vm369
    %v371 = vsel %vm370, %v363, %v367
    %v372 = vand.u32 2147483647, %v362
    %vm373 = vcmp.eq.f32.partialorder %v372, 8.507059e+37
    %v374 = vand.u32 %v362, 2147483648
    %v375 = vor.u32 1.1754944e-38, %v374
    %v376 = vsel %vm373, %v375, %v371
    %v377 = vmul.f32 1.0, %v376
    %v378 = vmul.f32 %v358, %v377
    %v379 = vld [vmem:[#allocation13] sm:$0xff]
    %v380 = vld [vmem:[#allocation13 + $0x8] sm:$0xff]
    %v381 = vld [vmem:[#allocation13 + $0x10] sm:$0xff]
    %v382 = vld [vmem:[#allocation13 + $0x18] sm:$0xff]
    %v383 = vld [vmem:[#allocation13 + $0x20] sm:$0xff]
    %v384 = vld [vmem:[#allocation13 + $0x28] sm:$0xff]
    %v385 = vld [vmem:[#allocation13 + $0x30] sm:$0xff]
    %v386 = vld [vmem:[#allocation13 + $0x38] sm:$0xff]
    %v387 = vld [vmem:[#allocation13 + $0x40] sm:$0xff]
    %v388 = vld [vmem:[#allocation13 + $0x48] sm:$0xff]
    %v389 = vld [vmem:[#allocation13 + $0x50] sm:$0xff]
    %v390 = vld [vmem:[#allocation13 + $0x58] sm:$0xff]
    %v391 = vld [vmem:[#allocation13 + $0x60] sm:$0xff]
    %v392 = vld [vmem:[#allocation13 + $0x68] sm:$0xff]
    %v393 = vld [vmem:[#allocation13 + $0x70] sm:$0xff]
    %v394 = vld [vmem:[#allocation13 + $0x78] sm:$0xff]
    %v395 = vld [vmem:[%s13] sm:$0x1]
    %v397 = vperm.slane %v395, 0
    %399 = vmatpush.msra.mxu0 %v394
    %400 = vmatpush.msra.mxu0 %v393
    %401 = vmatpush.msra.mxu0 %v392
    %402 = vmatpush.msra.mxu0 %v391
    %403 = vmatpush.msra.mxu0 %v390
    %404 = vmatpush.msra.mxu0 %v389
    %405 = vmatpush.msra.mxu0 %v388
    %406 = vmatpush.msra.mxu0 %v387
    %407 = vmatpush.msra.mxu0 %v386
    %408 = vmatpush.msra.mxu0 %v385
    %409 = vmatpush.msra.mxu0 %v384
    %410 = vmatpush.msra.mxu0 %v383
    %411 = vmatpush.msra.mxu0 %v382
    %412 = vmatpush.msra.mxu0 %v381
    %413 = vmatpush.msra.mxu0 %v380
    %414 = vmatpush.msra.mxu0 %v379
    %415 = vmatmul.f32.gmra.mxu0 %v378
    %v416 = vpop.f32.mrf.mxu0
    %v417 = vadd.f32 %v397, %v416
    %418 = vdwg.mxu0
    %v419 = vxor.u32 %v417, 2147483648
    %v420 = vmul.f32 %v419, 1.442695
    %v421 = vpow.pop %v420
    %v422 = vadd.f32 %v421, 1.0
    %v423 = vrcp.pop %v422
    %v424 = vmul.f32 %v422, %v423
    %v425 = vsub.f32 1.0, %v424
    %v426 = vmul.f32 %v423, %v425
    %v427 = vadd.f32 %v423, %v426
    %vm428 = vweird.f32 %v422
    %vm429 = vweird.f32 %v423
    %vm430 = vmor %vm428, %vm429
    %v431 = vsel %vm430, %v423, %v427
    %v432 = vand.u32 2147483647, %v422
    %vm433 = vcmp.eq.f32.partialorder %v432, 8.507059e+37
    %v434 = vand.u32 %v422, 2147483648
    %v435 = vor.u32 1.1754944e-38, %v434
    %v436 = vsel %vm433, %v435, %v431
    %v437 = vmul.f32 1.0, %v436
    %v438 = vmul.f32 %v417, %v437
    %v439 = vld [vmem:[%s14] sm:$0xff]
    %v440 = vld [vmem:[%s14 + $0x8] sm:$0xff]
    %v441 = vld [vmem:[%s14 + $0x10] sm:$0xff]
    %v442 = vld [vmem:[%s14 + $0x18] sm:$0xff]
    %v443 = vld [vmem:[%s14 + $0x20] sm:$0xff]
    %v444 = vld [vmem:[%s14 + $0x28] sm:$0xff]
    %v445 = vld [vmem:[%s14 + $0x30] sm:$0xff]
    %v446 = vld [vmem:[%s14 + $0x38] sm:$0xff]
    %v447 = vld [vmem:[%s14 + $0x40] sm:$0xff]
    %v448 = vld [vmem:[%s14 + $0x48] sm:$0xff]
    %v449 = vld [vmem:[%s14 + $0x50] sm:$0xff]
    %v450 = vld [vmem:[%s14 + $0x58] sm:$0xff]
    %v451 = vld [vmem:[%s14 + $0x60] sm:$0xff]
    %v452 = vld [vmem:[%s14 + $0x68] sm:$0xff]
    %v453 = vld [vmem:[%s14 + $0x70] sm:$0xff]
    %v454 = vld [vmem:[%s14 + $0x78] sm:$0xff]
    %v455 = vld [vmem:[%s15] sm:$0x1]
    %v457 = vperm.slane %v455, 0
    %459 = vmatpush.msra.mxu0 %v454
    %460 = vmatpush.msra.mxu0 %v453
    %461 = vmatpush.msra.mxu0 %v452
    %462 = vmatpush.msra.mxu0 %v451
    %463 = vmatpush.msra.mxu0 %v450
    %464 = vmatpush.msra.mxu0 %v449
    %465 = vmatpush.msra.mxu0 %v448
    %466 = vmatpush.msra.mxu0 %v447
    %467 = vmatpush.msra.mxu0 %v446
    %468 = vmatpush.msra.mxu0 %v445
    %469 = vmatpush.msra.mxu0 %v444
    %470 = vmatpush.msra.mxu0 %v443
    %471 = vmatpush.msra.mxu0 %v442
    %472 = vmatpush.msra.mxu0 %v441
    %473 = vmatpush.msra.mxu0 %v440
    %474 = vmatpush.msra.mxu0 %v439
    %475 = vmatmul.f32.gmra.mxu0 %v438
    %v476 = vpop.f32.mrf.mxu0
    %v477 = vadd.f32 %v457, %v476
    %478 = vdwg.mxu0
    %v479 = vld [vmem:[#allocation7] sm:$0xff]
    %v480 = vsub.f32 %v477, %v479
    %v481 = vmul.f32 %v480, %v480
    %v482 = vsel %vm203, %v481, 0.0
    %483 = vadd.xlane.f32.xlu0 %v482
    %v484 = vpop.xlane.xlu0 %483
    %v485 = vrot.slane %v484, 4
    %v486 = vadd.f32 %v484, %v485
    %v487 = vrot.slane %v486, 2
    %v488 = vadd.f32 %v486, %v487
    %v489 = vrot.slane %v488, 1
    %v490 = vadd.f32 %v488, %v489
    %s491 = vtos %v490
    %v492 = vstv %s491
    %493 = vst [vmem:[#allocation14] sm:$0xff] %v492
    // Predicated region
    $region94: #{tpu_custom_call.1} parent=1 // pred_check
      _
    $region95: #{tpu_custom_call.1} parent=1 // pred_check_branch
      %495 = sbr.rel (0) target = $region97
    $region96: #{tpu_custom_call.1} parent=1 // pred_region
      %497 = vsyncadd [#allocation4], 0
      %s499 = sshll.u32 [#allocation14], 4
      %s500 = int_to_ptr.vmem [resolvable:$true] %s499
      %s501 = sshll.u32 %s16, 4
      %s502 = int_to_ptr.hbm [resolvable:$true] %s501
      %504 = dma.vmem_to_hbm [thread:$0]  %s500, 128, %s502, [#allocation4]
    $region97: #{tpu_custom_call.1} parent=1 // pred_fallthru
      _
    // Predicated region
    $region98: #{tpu_custom_call.1} parent=1 // pred_check
      _
    $region99: #{tpu_custom_call.1} parent=1 // pred_check_branch
      %506 = sbr.rel (0) target = $region101
    $region100: #{tpu_custom_call.1} parent=1 // pred_region
      %508 = dma.done [#allocation4], 128
    $region101: #{tpu_custom_call.1} parent=1 // pred_fallthru
      _
    %509 = vsyncpa [#allocation3], 1
    %510 = vsyncpa [#allocation6], 1
    %511 = vsyncpa [#allocation9], 1
    %512 = vsyncpa [#allocation12], 1
    %513 = vsyncpa [#allocation4], 1

</llo_original>
